<compile_context>
chip_gen: v7x
topology: tpu7x:2x2x1
jax: 0.10.0
libtpu: 0.0.40
codegen_flags: <defaults>
</compile_context>

<pallas_src>
import jax
import jax.numpy as jnp
from jax.experimental import pallas as pl
from jax.experimental.pallas import tpu as pltpu


def _round_up(x, m):
    return ((x + m - 1) // m) * m


# ----------------------------------------------------------------------------
# Pallas kernel: (rt, K) @ (K, ct) + (1, ct)  -> (rt, ct), f32 accumulation
# ----------------------------------------------------------------------------
def _matmul_bias_kernel(a_ref, w_ref, b_ref, o_ref):
    o_ref[...] = (
        jnp.dot(a_ref[...], w_ref[...], preferred_element_type=jnp.float32)
        + b_ref[...]
    )


def matmul_bias(a, w, b, *, row_tile_target=256, col_tile_target=512):
    """Tiled (N, K) @ (K, M) + (M,) on the MXU.

    * bf16 operands / f32 accumulation.
    * N (rows) padded to the row tile; M (cols) padded to a multiple of 128 so
      output stores are lane-dense.  Padding is sliced off before returning.
    """
    n, k = a.shape
    k2, m = w.shape
    assert k == k2, (k, k2)

    # ---- tile selection -----------------------------------------------------
    if n >= 2 * row_tile_target:
        rt = row_tile_target
    else:
        # small problem: make >=2 row tiles when possible (v7x has 2 TCs);
        # keep the sublane dim a multiple of 16 (bf16 packing).
        rt = max(16, _round_up(pl.cdiv(n, 2), 16))
    n_pad = _round_up(n, rt)

    m_pad = _round_up(m, 128)                 # lane-dense output columns
    ct = m_pad
    for cand in (col_tile_target, 384, 256, 128):
        if cand <= m_pad and m_pad % cand == 0:
            ct = cand
            break

    # ---- operand prep: bf16 matmul inputs, f32 bias --------------------------
    a_p = jnp.pad(a.astype(jnp.bfloat16), ((0, n_pad - n), (0, 0)))
    w_p = jnp.pad(w.astype(jnp.bfloat16), ((0, 0), (0, m_pad - m)))
    b_p = jnp.pad(b.astype(jnp.float32), (0, m_pad - m)).reshape(1, m_pad)

    grid = (n_pad // rt, m_pad // ct)
    out = pl.pallas_call(
        _matmul_bias_kernel,
        out_shape=jax.ShapeDtypeStruct((n_pad, m_pad), jnp.float32),
        grid=grid,
        in_specs=[
            pl.BlockSpec((rt, k), lambda i, j: (i, 0)),   # token tile (full K resident)
            pl.BlockSpec((k, ct), lambda i, j: (0, j)),   # weight column tile
            pl.BlockSpec((1, ct), lambda i, j: (0, j)),   # bias column tile
        ],
        out_specs=pl.BlockSpec((rt, ct), lambda i, j: (i, j)),
        compiler_params=pltpu.CompilerParams(
            dimension_semantics=("parallel", "parallel"),
            vmem_limit_bytes=48 * 1024 * 1024,            # headroom vs v7x's 64 MiB
        ),
    )(a_p, w_p, b_p)

    return out[:n, :m]


# ----------------------------------------------------------------------------
# Patch extraction (JAX layout glue; the GEMM runs in Pallas)
# ----------------------------------------------------------------------------
def _extract_patches(x_nhwc, kh, kw, stride, pad):
    """Returns (B*Ho*Wo, kh*kw*Cin) with feature order (kh, kw, Cin), plus Ho, Wo."""
    b, h, w, c = x_nhwc.shape
    if stride == kh == kw and pad == 0 and h % kh == 0 and w % kw == 0:
        # Non-overlapping patches (PatchEmbed default): pure reshape/transpose,
        # every input element appears exactly once -> no HBM duplication.
        ho, wo = h // kh, w // kw
        p = x_nhwc.reshape(b, ho, kh, wo, kw, c)
        p = jnp.transpose(p, (0, 1, 3, 2, 4, 5))          # (b, ho, wo, kh, kw, c)
        return p.reshape(b * ho * wo, kh * kw * c), ho, wo

    # General (overlapping / padded) conv: im2col via strided slices.
    xp = jnp.pad(x_nhwc, ((0, 0), (pad, pad), (pad, pad), (0, 0)))
    ho = (h + 2 * pad - kh) // stride + 1
    wo = (w + 2 * pad - kw) // stride + 1
    cols = []
    for i in range(kh):
        for j in range(kw):
            cols.append(
                jax.lax.slice(
                    xp,
                    (0, i, j, 0),
                    (b, i + (ho - 1) * stride + 1, j + (wo - 1) * stride + 1, c),
                    (1, stride, stride, 1),
                )
            )
    patches = jnp.stack(cols, axis=3)                     # (b, ho, wo, kh*kw, c)
    return patches.reshape(b * ho * wo, kh * kw * c), ho, wo


# ----------------------------------------------------------------------------
# PatchEmbed forward: Conv2d(in_chans, embed_dim, patch, stride, pad) + Identity
# ----------------------------------------------------------------------------
def patch_embed_forward(x_nchw, w_oihw, bias, *, patch_size, stride, padding):
    """Input NCHW, output NCHW (matches the PyTorch module)."""
    x = jnp.transpose(x_nchw, (0, 2, 3, 1))               # NCHW -> NHWC
    b = x.shape[0]
    embed_dim, cin, kh, kw = w_oihw.shape

    patches, ho, wo = _extract_patches(x, kh, kw, stride, padding)
    # Feature order of `patches` is (kh, kw, Cin) -> flatten weight to match.
    w_flat = jnp.transpose(w_oihw, (2, 3, 1, 0)).reshape(kh * kw * cin, embed_dim)

    tok = matmul_bias(patches, w_flat, bias)               # (B*Ho*Wo, embed_dim) f32
    out = tok.reshape(b, ho, wo, embed_dim)
    return jnp.transpose(out, (0, 3, 1, 2))                # NHWC -> NCHW


# ----------------------------------------------------------------------------
# Pure-JAX reference (correctness check only)
# ----------------------------------------------------------------------------
def _ref_forward(x_nchw, w_oihw, bias, *, stride, padding):
    y = jax.lax.conv_general_dilated(
        x_nchw, w_oihw, (stride, stride), [(padding, padding), (padding, padding)],
        dimension_numbers=("NCHW", "OIHW", "NCHW"))
    return y + bias[None, :, None, None]


if __name__ == "__main__":
    # Small PatchEmbed config: patch_size=4, stride=4, padding=0,
    # in_chans=3, embed_dim=128, input (2, 3, 32, 32) -> output (2, 128, 8, 8).
    PATCH, STRIDE, PAD = 4, 4, 0
    IN_CHANS, EMBED_DIM = 3, 128
    B, H, W = 2, 32, 32

    key = jax.random.PRNGKey(0)
    kx, kw_, kb = jax.random.split(key, 3)
    x = jax.random.normal(kx, (B, IN_CHANS, H, W), jnp.float32)
    w = 0.02 * jax.random.normal(kw_, (EMBED_DIM, IN_CHANS, PATCH, PATCH), jnp.float32)
    bias = 0.01 * jax.random.normal(kb, (EMBED_DIM,), jnp.float32)

    out = patch_embed_forward(x, w, bias, patch_size=PATCH, stride=STRIDE, padding=PAD)
    out = jax.block_until_ready(out)
    assert out.shape == (B, EMBED_DIM, H // STRIDE, W // STRIDE), out.shape

    ref = _ref_forward(x, w, bias, stride=STRIDE, padding=PAD)
    # bf16 MXU operands with f32 accumulation -> slightly looser tolerance than f32.
    assert jnp.allclose(out, ref, rtol=2e-2, atol=2e-2), (
        float(jnp.max(jnp.abs(out - ref))))

    print("KERNEL_OK")
</pallas_src>

<mosaic_0001>
module attributes {stable_mosaic.version = 11 : i64} {
  func.func @_matmul_bias_kernel(%arg0: i32, %arg1: i32, %arg2: memref<64x48xbf16, #tpu.memory_space<vmem>>, %arg3: memref<48x128xbf16, #tpu.memory_space<vmem>>, %arg4: memref<1x128xf32, #tpu.memory_space<vmem>>, %arg5: memref<64x128xf32, #tpu.memory_space<vmem>>) attributes {dimension_semantics = [#tpu.dimension_semantics<parallel>, #tpu.dimension_semantics<parallel>], iteration_bounds = array<i64: 2, 1>, scalar_prefetch = 0 : i64, scratch_operands = 0 : i64, tpu.core_type = #tpu.core_type<tc>, window_params = [{transform_indices = @transform_0, window_bounds = array<i64: 64, 48>}, {transform_indices = @transform_1, window_bounds = array<i64: 48, 128>}, {transform_indices = @transform_2, window_bounds = array<i64: 1, 128>}, {transform_indices = @transform_3, window_bounds = array<i64: 64, 128>}]} {
    %c0 = arith.constant 0 : index
    %c0_0 = arith.constant 0 : index
    %0 = vector.load %arg2[%c0, %c0_0] : memref<64x48xbf16, #tpu.memory_space<vmem>>, vector<64x48xbf16>
    %c0_1 = arith.constant 0 : index
    %c0_2 = arith.constant 0 : index
    %1 = vector.load %arg3[%c0_1, %c0_2] : memref<48x128xbf16, #tpu.memory_space<vmem>>, vector<48x128xbf16>
    %cst = arith.constant dense<0.000000e+00> : vector<64x128xf32>
    %2 = tpu.matmul %0, %1, %cst {dimension_numbers = #tpu.dot_dimension_numbers<[1], [0], [0], [1], [0, 0, 1, 1], [], []>} : vector<64x48xbf16>, vector<48x128xbf16>, vector<64x128xf32> -> vector<64x128xf32>
    %c0_3 = arith.constant 0 : index
    %c0_4 = arith.constant 0 : index
    %3 = vector.load %arg4[%c0_3, %c0_4] : memref<1x128xf32, #tpu.memory_space<vmem>>, vector<1x128xf32>
    %4 = vector.broadcast %3 : vector<1x128xf32> to vector<64x128xf32>
    %5 = arith.addf %2, %4 : vector<64x128xf32>
    %c0_5 = arith.constant 0 : index
    %c0_6 = arith.constant 0 : index
    %6 = vector.load %arg5[%c0_5, %c0_6] : memref<64x128xf32, #tpu.memory_space<vmem>>, vector<64x128xf32>
    tpu.vector_store %arg5[%c0_5, %c0_6], %5 {strides = array<i32>} : memref<64x128xf32, #tpu.memory_space<vmem>>, vector<64x128xf32>,
    return
  }
  func.func @transform_0(%arg0: i32, %arg1: i32) -> (i32, i32) {
    %c0_i32 = arith.constant 0 : i32
    %c0_i32_0 = arith.constant 0 : i32
    return %arg0, %c0_i32 : i32, i32
  }
  func.func @transform_1(%arg0: i32, %arg1: i32) -> (i32, i32) {
    %c0_i32 = arith.constant 0 : i32
    %c0_i32_0 = arith.constant 0 : i32
    return %c0_i32, %arg1 : i32, i32
  }
  func.func @transform_2(%arg0: i32, %arg1: i32) -> (i32, i32) {
    %c0_i32 = arith.constant 0 : i32
    %c0_i32_0 = arith.constant 0 : i32
    return %c0_i32, %arg1 : i32, i32
  }
  func.func @transform_3(%arg0: i32, %arg1: i32) -> (i32, i32) {
    %c0_i32 = arith.constant 0 : i32
    return %arg0, %arg1 : i32, i32
  }
}

</mosaic_0001>

<llo_original>
// kernel: tpu_custom_call.1
$region0: #{tpu_custom_call.1}
  #allocation0 [shape = 'u32[]', space=smem, size = 0x4, offset = 0x4, fixed_abs, tag = 'smem constant byte address 0x4 - core index']
  #allocation1 [shape = 'u32[144,128]{1,0:T(1,128)}', space=vmem, size = 0x12000, scoped, tag = 'internal scratch']
  %s0 = inlined_call_operand.vmem [shape: bf16[128,48], index: 0, kind: input, shape index: {}]
  %s1 = inlined_call_operand.vmem [shape: bf16[48,128], index: 1, kind: input, shape index: {}]
  %s2 = inlined_call_operand.vmem [shape: f32[1,128], index: 2, kind: input, shape index: {}]
  %s3 = inlined_call_operand.hbm [shape: f32[128,128], index: 3, kind: output, shape index: {}]
  %s4 = sld [smem:[#allocation0]]
  $region45: #{tpu_custom_call.1} parent=0
    _
  %s6 = ssub.s32 1, %s4
  %s7 = scalar_select 0, %s6, %s4
  $region1: #{tpu_custom_call.1} parent=0
    #allocation2 [shape = 'u8[65536]{0}', space=vmem, size = 0x10000, scoped, tag = 'output window, operand 0']
    #allocation3 [shape = 's32[2]{0}', space=sflag, size = 0x8, scoped, tag = 'scoped memory for tpu_custom_call.1']
    %8 = vsyncpa [#allocation3], 0
    %s9 = scalar_lea.sflag [#allocation3], 1
    %10 = vsyncpa %s9, 0
    loop: start=0, step=1, limit=4
    $region2: #{tpu_custom_call.1} parent=1 // loop_pre_header
      _
    $region3: #{tpu_custom_call.1} parent=1 // loop_header
      %s12 = sphi 0, %s16
      %p13 = scmp.ge.s32.totalorder %s12, 4
      %s19 = sphi 0, %s31
      %s20 = sphi 0, %s27
      %s21 = sphi 0, %s19
      %s22 = sphi 0, %s20
      %s23 = sphi 0, %s21
      %s24 = sphi 0, %s22
      %s34 = sphi 0, %s36
      %s37 = sphi 0, %s34
      %s38 = sphi 0, %s37
      %s54 = sphi 0, %s38
      %s60 = sphi 0, %s62
      %s63 = sphi 0, %s60
      %s64 = sphi 0, %s63
      %s80 = sphi 0, %s64
      %s86 = sphi 0, %s88
      %s89 = sphi 0, %s86
      %s90 = sphi 0, %s89
      %s106 = sphi 0, %s90
      %s114 = sphi 0, %s116
      %s117 = sphi 0, %s114
      %s118 = sphi 0, %s117
      %s134 = sphi 0, %s118
    $region4: #{tpu_custom_call.1} parent=1 // loop_header_branch
      %15 = sbr.rel (%p13) target = $region8
    $region5: #{tpu_custom_call.1} parent=1 // loop_body
      %s17 = ssub.s32 %s12, 1
      %s18 = ssub.s32 %s12, 2
      %s25 = sadd.s32 1, %s20
      %p26 = scmp.ge.s32.totalorder %s25, 1
      %s27 = scalar_select %p26, 0, %s25
      %s28 = sadd.s32 1, %s19
      %s29 = scalar_select %p26, %s28, %s19
      %p30 = scmp.ge.s32.totalorder %s29, 2
      %s31 = scalar_select %p30, 0, %s29
      %s32 = ssub.s32 %s19, %s31
      %p33 = scmp.eq.s32.totalorder %s32, 0
      %s35 = sadd.s32 %s34, 1
      %s36 = scalar_select %p33, %s34, %s35
      %p39 = pneg %p33
      %p40 = scmp.eq.s32.totalorder %s12, 1
      %p41 = por %p39, %p40
      %p42 = scmp.ne.s32.totalorder %s34, %s37
      %p43 = scmp.eq.s32.totalorder %s12, 0
      %p44 = por %p42, %p43
      %p45 = scmp.ne.s32.totalorder %s34, %s37
      %p46 = scmp.eq.s32.totalorder %s17, 1
      %p47 = por %p45, %p46
      %p48 = scmp.ne.s32.totalorder %s37, %s38
      %p49 = scmp.eq.s32.totalorder %s17, 0
      %p50 = por %p48, %p49
      %p51 = scmp.ne.s32.totalorder %s37, %s38
      %p52 = scmp.eq.s32.totalorder %s18, 1
      %p53 = por %p51, %p52
      %p55 = scmp.ne.s32.totalorder %s38, %s54
      %p56 = scmp.eq.s32.totalorder %s18, 0
      %p57 = por %p55, %p56
      %s58 = ssub.s32 %s20, %s27
      %p59 = scmp.eq.s32.totalorder %s58, 0
      %s61 = sadd.s32 %s60, 1
      %s62 = scalar_select %p59, %s60, %s61
      %p65 = pneg %p59
      %p66 = scmp.eq.s32.totalorder %s12, 1
      %p67 = por %p65, %p66
      %p68 = scmp.ne.s32.totalorder %s60, %s63
      %p69 = scmp.eq.s32.totalorder %s12, 0
      %p70 = por %p68, %p69
      %p71 = scmp.ne.s32.totalorder %s60, %s63
      %p72 = scmp.eq.s32.totalorder %s17, 1
      %p73 = por %p71, %p72
      %p74 = scmp.ne.s32.totalorder %s63, %s64
      %p75 = scmp.eq.s32.totalorder %s17, 0
      %p76 = por %p74, %p75
      %p77 = scmp.ne.s32.totalorder %s63, %s64
      %p78 = scmp.eq.s32.totalorder %s18, 1
      %p79 = por %p77, %p78
      %p81 = scmp.ne.s32.totalorder %s64, %s80
      %p82 = scmp.eq.s32.totalorder %s18, 0
      %p83 = por %p81, %p82
      %s84 = ssub.s32 %s20, %s27
      %p85 = scmp.eq.s32.totalorder %s84, 0
      %s87 = sadd.s32 %s86, 1
      %s88 = scalar_select %p85, %s86, %s87
      %p91 = pneg %p85
      %p92 = scmp.eq.s32.totalorder %s12, 1
      %p93 = por %p91, %p92
      %p94 = scmp.ne.s32.totalorder %s86, %s89
      %p95 = scmp.eq.s32.totalorder %s12, 0
      %p96 = por %p94, %p95
      %p97 = scmp.ne.s32.totalorder %s86, %s89
      %p98 = scmp.eq.s32.totalorder %s17, 1
      %p99 = por %p97, %p98
      %p100 = scmp.ne.s32.totalorder %s89, %s90
      %p101 = scmp.eq.s32.totalorder %s17, 0
      %p102 = por %p100, %p101
      %p103 = scmp.ne.s32.totalorder %s89, %s90
      %p104 = scmp.eq.s32.totalorder %s18, 1
      %p105 = por %p103, %p104
      %p107 = scmp.ne.s32.totalorder %s90, %s106
      %p108 = scmp.eq.s32.totalorder %s18, 0
      %p109 = por %p107, %p108
      %s110 = ssub.s32 %s19, %s31
      %s111 = ssub.s32 %s20, %s27
      %s112 = sor.u32 %s110, %s111
      %p113 = scmp.eq.s32.totalorder %s112, 0
      %s115 = sadd.s32 %s114, 1
      %s116 = scalar_select %p113, %s114, %s115
      %p119 = pneg %p113
      %p120 = scmp.eq.s32.totalorder %s12, 1
      %p121 = por %p119, %p120
      %p122 = scmp.ne.s32.totalorder %s114, %s117
      %p123 = scmp.eq.s32.totalorder %s12, 0
      %p124 = por %p122, %p123
      %p125 = scmp.ne.s32.totalorder %s114, %s117
      %p126 = scmp.eq.s32.totalorder %s17, 1
      %p127 = por %p125, %p126
      %p128 = scmp.ne.s32.totalorder %s117, %s118
      %p129 = scmp.eq.s32.totalorder %s17, 0
      %p130 = por %p128, %p129
      %p131 = scmp.ne.s32.totalorder %s117, %s118
      %p132 = scmp.eq.s32.totalorder %s18, 1
      %p133 = por %p131, %p132
      %p135 = scmp.ne.s32.totalorder %s118, %s134
      %p136 = scmp.eq.s32.totalorder %s18, 0
      %p137 = por %p135, %p136
      %p138 = scmp.le.s32.totalorder 1, %s12
      %p139 = scmp.lt.s32.totalorder %s12, 3
      %p140 = pnand %p138, %p139
      %p141 = pneg %p140
      // Predicated region
      $region9: #{tpu_custom_call.1} parent=5 // pred_check
        _
      $region10: #{tpu_custom_call.1} parent=5 // pred_check_branch
        %143 = sbr.rel (%p140) target = $region12
      $region11: #{tpu_custom_call.1} parent=5 // pred_region
        %s144 = ssub.s32 %s12, 1
        // Predicated region
        $region13: #{tpu_custom_call.1} parent=11 // pred_check
          %p145 = pneg %p76
        $region14: #{tpu_custom_call.1} parent=11 // pred_check_branch
          %147 = sbr.rel (%p145) target = $region16
        $region15: #{tpu_custom_call.1} parent=11 // pred_region
          %p148 = scmp.lt.s32.totalorder %s22, 0
          %s149 = scalar_select %p148, %s22, 0
          %s150 = smul.addr %s149, 4
          %s151 = scalar_lea.vmem %s1, %s150
        $region16: #{tpu_custom_call.1} parent=11 // pred_fallthru
          _
        // Predicated region
        $region17: #{tpu_custom_call.1} parent=11 // pred_check
          %p152 = pneg %p102
        $region18: #{tpu_custom_call.1} parent=11 // pred_check_branch
          %154 = sbr.rel (%p152) target = $region20
        $region19: #{tpu_custom_call.1} parent=11 // pred_region
          %p155 = scmp.lt.s32.totalorder %s22, 0
          %s156 = scalar_select %p155, %s22, 0
          %s157 = scalar_lea.vmem %s2, %s156
        $region20: #{tpu_custom_call.1} parent=11 // pred_fallthru
          _
      $region12: #{tpu_custom_call.1} parent=5 // pred_fallthru
        _
      %p158 = scmp.lt.s32.totalorder %s12, 2
      // Predicated region
      $region21: #{tpu_custom_call.1} parent=5 // pred_check
        %p159 = pneg %p158
      $region22: #{tpu_custom_call.1} parent=5 // pred_check_branch
        %161 = sbr.rel (%p159) target = $region24
      $region23: #{tpu_custom_call.1} parent=5 // pred_region
        // Predicated region
        $region25: #{tpu_custom_call.1} parent=23 // pred_check
          %p162 = pneg %p44
        $region26: #{tpu_custom_call.1} parent=23 // pred_check_branch
          %164 = sbr.rel (%p162) target = $region28
        $region27: #{tpu_custom_call.1} parent=23 // pred_region
          %s165 = smul.u32 8, %s19
          %p166 = scmp.lt.s32.totalorder %s165, 15
          %s167 = scalar_select %p166, %s165, 15
          %s168 = smul.addr %s167, 4
          %s169 = scalar_lea.vmem %s0, %s168
          %s170 = smul.u32 8, %s19
        $region28: #{tpu_custom_call.1} parent=23 // pred_fallthru
          _
      $region24: #{tpu_custom_call.1} parent=5 // pred_fallthru
        _
      %p171 = scmp.le.s32.totalorder 1, %s12
      %p172 = scmp.lt.s32.totalorder %s12, 3
      %p173 = pnand %p171, %p172
      %p174 = pneg %p173
      // Predicated region
      $region29: #{tpu_custom_call.1} parent=5 // pred_check
        _
      $region30: #{tpu_custom_call.1} parent=5 // pred_check_branch
        %176 = sbr.rel (%p173) target = $region32
      $region31: #{tpu_custom_call.1} parent=5 // pred_region
        %s177 = ssub.s32 %s12, 1
        %s178 = smul.u32 8, %s21
        %p179 = scmp.lt.s32.totalorder %s178, 15
        %s180 = scalar_select %p179, %s178, 15
        %s181 = smul.addr %s180, 4
        %s182 = scalar_lea.vmem %s0, %s181
        %p183 = pneg %p50
        %p184 = pneg %p47
        %p185 = scmp.lt.s32.totalorder %s22, 0
        %s186 = scalar_select %p185, %s22, 0
        %s187 = smul.addr %s186, 4
        %s188 = scalar_lea.vmem %s1, %s187
        %p189 = pneg %p76
        %p190 = pneg %p73
        %p191 = scmp.lt.s32.totalorder %s22, 0
        %s192 = scalar_select %p191, %s22, 0
        %s193 = scalar_lea.vmem %s2, %s192
        %p194 = pneg %p102
        %p195 = pneg %p99
        %p196 = pneg %p130
        %p197 = pneg %p127
        %s198 = sand.u32 %s117, 1
        %s199 = scalar_lea.sflag [#allocation3], %s198
        %s200 = sand.u32 %s117, 1
        %s201 = smul.addr %s200, 64
        %s202 = scalar_lea.vmem [#allocation2], %s201
        %s203 = smul.u32 8, %s21
        %p204 = scmp.lt.s32.totalorder %s203, 15
        %s205 = scalar_select %p204, %s203, 15
        %s206 = smul.addr %s205, 4
        %s207 = scalar_lea.vmem %s0, %s206
        %s208 = smul.u32 8, %s21
        %p209 = scmp.lt.s32.totalorder %s22, 0
        %s210 = scalar_select %p209, %s22, 0
        %s211 = smul.addr %s210, 4
        %s212 = scalar_lea.vmem %s1, %s211
        %p213 = scmp.lt.s32.totalorder %s22, 0
        %s214 = scalar_select %p213, %s22, 0
        %s215 = scalar_lea.vmem %s2, %s214
        %s216 = smul.u32 8, %s21
        %v218 = vld [vmem:[%s207] sm:$0xf]
        %v219 = vld [vmem:[%s207 + $0x4] sm:$0xf]
        %v220 = vld [vmem:[%s207 + $0x8] sm:$0xf]
        %v221 = vld [vmem:[%s207 + $0xc] sm:$0xf]
        %v222 = vld [vmem:[%s207 + $0x10] sm:$0xf]
        %v223 = vld [vmem:[%s207 + $0x14] sm:$0xf]
        %v224 = vld [vmem:[%s207 + $0x18] sm:$0xf]
        %v225 = vld [vmem:[%s207 + $0x1c] sm:$0xf]
        %v226 = vld [vmem:[%s212] sm:$0xf]
        %v227 = vld [vmem:[%s212 + $0x4] sm:$0xf]
        %v228 = vld [vmem:[%s212 + $0x8] sm:$0xf]
        %v229 = vld [vmem:[%s212 + $0xc] sm:$0xf]
        %v230 = vld [vmem:[%s212 + $0x10] sm:$0xf]
        %v231 = vld [vmem:[%s212 + $0x14] sm:$0xf]
        %v232 = vld [vmem:[%s215] sm:$0x1]
        %v234 = vlaneseq
        %v235 = vshrl.u32 %v234, 7
        %v236 = vsub.s32 0, %v235
        %v237 = vrot.slane %v232, %v236
        %v247 = vunpack.c.l.b16 %v218
        %v248 = vunpack.c.l.b16 %v219
        %v249 = vunpack.c.l.b16 %v220
        %v250 = vunpack.c.l.b16 %v221
        %v251 = vunpack.c.l.b16 %v222
        %v252 = vunpack.c.l.b16 %v223
        %v253 = vunpack.c.l.b16 %v224
        %v254 = vunpack.c.l.b16 %v225
        %v255 = vpack.c.b16 %v248, %v247
        %v256 = vpack.c.b16 %v250, %v249
        %v257 = vpack.c.b16 %v252, %v251
        %v258 = vpack.c.b16 %v254, %v253
        %v265 = vunpack.c.l.b16 %v226
        %v266 = vunpack.c.l.b16 %v227
        %v267 = vunpack.c.l.b16 %v228
        %v268 = vunpack.c.l.b16 %v229
        %v269 = vunpack.c.l.b16 %v230
        %v270 = vunpack.c.l.b16 %v231
        %v271 = vpack.c.b16 %v266, %v265
        %v272 = vpack.c.b16 %v268, %v267
        %v273 = vpack.c.b16 %v270, %v269
        %vm277 = vcmask 392192
        %v279 = vsel %vm277, %v255, 0
        %v282 = vsel %vm277, %v256, 0
        %v285 = vsel %vm277, %v257, 0
        %v288 = vsel %vm277, %v258, 0
        %290 = vmatprep.subr.bf16.mxu0 0
        %291 = vmatpush1.bf16.msra.mxu0 %v271
        %292 = vmatprep.subr.bf16.mxu0 0
        %293 = vmatpush1.bf16.msra.mxu0 %v272
        %294 = vmatprep.subr.bf16.mxu0 0
        %295 = vmatpush1.bf16.msra.mxu0 %v273
        %296 = vmatprep.subr.bf16.mxu0 0
        %297 = vmatpush1.bf16.msra.mxu0 0
        %298 = vmatprep.subr.bf16.mxu0 0
        %299 = vmatpush1.bf16.msra.mxu0 0
        %300 = vmatprep.subr.bf16.mxu0 0
        %301 = vmatpush1.bf16.msra.mxu0 0
        %302 = vmatprep.subr.bf16.mxu0 0
        %303 = vmatpush1.bf16.msra.mxu0 0
        %304 = vmatprep.subr.bf16.mxu0 0
        %305 = vmatpush1.bf16.msra.mxu0 0
        %306 = vmatprep.subr.bf16.mxu0 0
        %307 = vmatpush1.bf16.msra.mxu0 0
        %308 = vmatprep.subr.bf16.mxu0 0
        %309 = vmatpush1.bf16.msra.mxu0 0
        %310 = vmatprep.subr.bf16.mxu0 0
        %311 = vmatpush1.bf16.msra.mxu0 0
        %312 = vmatprep.subr.bf16.mxu0 0
        %313 = vmatpush1.bf16.msra.mxu0 0
        %314 = vmatprep.subr.bf16.mxu0 0
        %315 = vmatpush1.bf16.msra.mxu0 0
        %316 = vmatprep.subr.bf16.mxu0 0
        %317 = vmatpush1.bf16.msra.mxu0 0
        %318 = vmatprep.subr.bf16.mxu0 0
        %319 = vmatpush1.bf16.msra.mxu0 0
        %320 = vmatprep.subr.bf16.mxu0 0
        %321 = vmatpush1.bf16.msra.mxu0 0
        %322 = vmatprep.mubr.bf16.mxu0 0
        %323 = vmatmul.mubr.bf16.gmra.mrb[0].mxu0 %v279
        %v324 = vpop.f32.mrb[0].mxu0
        %v325 = vadd.f32 %v237, %v324
        %v326 = vpop.f32.mrb[0].mxu0
        %v327 = vpop.f32.mrb[0].mxu0
        %v328 = vadd.f32 %v237, %v327
        %v329 = vpop.f32.mrb[0].mxu0
        %330 = vmatprep.mubr.bf16.mxu0 0
        %331 = vmatmul.mubr.bf16.gmra.mrb[0].mxu0 %v282
        %v332 = vpop.f32.mrb[0].mxu0
        %v333 = vadd.f32 %v237, %v332
        %v334 = vpop.f32.mrb[0].mxu0
        %v335 = vpop.f32.mrb[0].mxu0
        %v336 = vadd.f32 %v237, %v335
        %v337 = vpop.f32.mrb[0].mxu0
        %338 = vmatprep.mubr.bf16.mxu0 0
        %339 = vmatmul.mubr.bf16.gmra.mrb[0].mxu0 %v285
        %v340 = vpop.f32.mrb[0].mxu0
        %v341 = vadd.f32 %v237, %v340
        %v342 = vpop.f32.mrb[0].mxu0
        %v343 = vpop.f32.mrb[0].mxu0
        %v344 = vadd.f32 %v237, %v343
        %v345 = vpop.f32.mrb[0].mxu0
        %346 = vmatprep.mubr.bf16.mxu0 0
        %347 = vmatmul.mubr.bf16.gmra.mrb[0].mxu0 %v288
        %v348 = vpop.f32.mrb[0].mxu0
        %v349 = vadd.f32 %v237, %v348
        %v350 = vpop.f32.mrb[0].mxu0
        %v351 = vpop.f32.mrb[0].mxu0
        %v352 = vadd.f32 %v237, %v351
        %v353 = vpop.f32.mrb[0].mxu0
        %354 = vdwg.mxu0
        %355 = vst [vmem:[%s202] sm:$0xff] %v325
        %356 = vst [vmem:[%s202 + $0x8] sm:$0xff] %v328
        %357 = vst [vmem:[%s202 + $0x10] sm:$0xff] %v333
        %358 = vst [vmem:[%s202 + $0x18] sm:$0xff] %v336
        %359 = vst [vmem:[%s202 + $0x20] sm:$0xff] %v341
        %360 = vst [vmem:[%s202 + $0x28] sm:$0xff] %v344
        %361 = vst [vmem:[%s202 + $0x30] sm:$0xff] %v349
        %362 = vst [vmem:[%s202 + $0x38] sm:$0xff] %v352
        %s363 = sand.u32 %s117, 1
        %s364 = scalar_lea.sflag [#allocation3], %s363
        %s365 = sand.u32 %s117, 1
        %s366 = smul.addr %s365, 64
        %s367 = scalar_lea.vmem [#allocation2], %s366
        // Predicated region
        $region33: #{tpu_custom_call.1} parent=31 // pred_check
          %p368 = pneg %p127
        $region34: #{tpu_custom_call.1} parent=31 // pred_check_branch
          %370 = sbr.rel (%p368) target = $region36
        $region35: #{tpu_custom_call.1} parent=31 // pred_region
          %s371 = smul.u32 8, %s21
          %s373 = ssub.s32 1024, 1024
          %374 = vsyncadd %s364, %s373
          %s375 = sadd.s32 %s22, %s371
          %s376 = smul.addr %s375, 128
          %s377 = scalar_lea.hbm %s3, %s376
          %s378 = sshll.u32 %s367, 4
          %s379 = int_to_ptr.vmem [resolvable:$true] %s378
          %384 = dma.vmem_to_hbm [thread:$0]  %s379, 1024, %s377, %s364, 128, 128, 8
        $region36: #{tpu_custom_call.1} parent=31 // pred_fallthru
          _
      $region32: #{tpu_custom_call.1} parent=5 // pred_fallthru
        _
      %p385 = scmp.le.s32.totalorder 2, %s12
      // Predicated region
      $region37: #{tpu_custom_call.1} parent=5 // pred_check
        %p386 = pneg %p385
      $region38: #{tpu_custom_call.1} parent=5 // pred_check_branch
        %388 = sbr.rel (%p386) target = $region40
      $region39: #{tpu_custom_call.1} parent=5 // pred_region
        %s389 = ssub.s32 %s12, 2
        // Predicated region
        $region41: #{tpu_custom_call.1} parent=39 // pred_check
          %p390 = pneg %p133
        $region42: #{tpu_custom_call.1} parent=39 // pred_check_branch
          %392 = sbr.rel (%p390) target = $region44
        $region43: #{tpu_custom_call.1} parent=39 // pred_region
          %s393 = sand.u32 %s118, 1
          %s394 = scalar_lea.sflag [#allocation3], %s393
          %s395 = sand.u32 %s118, 1
          %s396 = smul.addr %s395, 64
          %s397 = scalar_lea.vmem [#allocation2], %s396
          %398 = dma.done %s394, 1024
        $region44: #{tpu_custom_call.1} parent=39 // pred_fallthru
          _
      $region40: #{tpu_custom_call.1} parent=5 // pred_fallthru
        _
    $region6: #{tpu_custom_call.1} parent=1 // loop_footer
      %s16 = sadd.s32 1, %s12
    $region7: #{tpu_custom_call.1} parent=1 // loop_footer_branch
      %11 = sbr.rel target = $region3
    $region8: #{tpu_custom_call.1} parent=1 // loop_exit
      _
    %399 = vsyncpa [#allocation3], 1
    %s400 = scalar_lea.sflag [#allocation3], 1
    %401 = vsyncpa %s400, 1

</llo_original>
